<compile_context>
chip_gen: v6e
topology: v6e:2x2x1
jax: 0.10.0
libtpu: 0.0.40
codegen_flags: <defaults>
</compile_context>

<pallas_src>
import numpy as np
import jax
import jax.numpy as jnp
from jax import lax
from jax.experimental import pallas as pl
from jax.experimental.pallas import tpu as pltpu

EOS_TOKEN_ID = 2
PAD_TOKEN_ID = 1

# Review: 128 pairs/step on v5e, 256 on v6e/v7x.  128 is already MXU-dense
# (M=128) and keeps VMEM use modest on every generation, so use it everywhere.
TILE_N_MAX = 128


def _round_up(x, m):
    return (x + m - 1) // m * m


# ----------------------------------------------------------------------------
# Fused kernel: one grid step processes TILE_N pairs.  Both classification
# heads (dense -> tanh -> out_proj), the softmaxes, the fused probability and
# the per-pair cross-entropy terms are computed in a single invocation.
# ----------------------------------------------------------------------------
def _fused_pair_kernel(f1_ref, f2_ref, oh_ref,                 # (TILE_N, 2D) bf16 x2, (TILE_N, 2) f32
                       w1a_ref, b1a_ref, w2a_ref, b2a_ref,     # head 1 params
                       w1b_ref, b1b_ref, w2b_ref, b2b_ref,     # head 2 params
                       prob_ref, loss_ref):                    # (TILE_N, 2), (TILE_N, 1) f32

    # head(x) = out_proj(tanh(dense(x))) ; dropout is identity in eval mode.
    def head(f_ref, w1_ref, b1_ref, w2_ref, b2_ref):
        h = (jnp.dot(f_ref[...], w1_ref[...],
                     preferred_element_type=jnp.float32) + b1_ref[...])
        h = jnp.tanh(h).astype(w2_ref.dtype)                   # bf16 back onto the MXU
        return (jnp.dot(h, w2_ref[...],
                        preferred_element_type=jnp.float32) + b2_ref[...])

    def log_softmax(l):
        z = l - jnp.max(l, axis=-1, keepdims=True)
        return z - jnp.log(jnp.sum(jnp.exp(z), axis=-1, keepdims=True))

    lp1 = log_softmax(head(f1_ref, w1a_ref, b1a_ref, w2a_ref, b2a_ref))   # (TILE_N, 2)
    lp2 = log_softmax(head(f2_ref, w1b_ref, b1b_ref, w2b_ref, b2b_ref))   # (TILE_N, 2)

    # fused probability: (softmax(logits_1) + softmax(logits_2)) / 2
    prob_ref[...] = 0.5 * (jnp.exp(lp1) + jnp.exp(lp2))

    # per-pair CE term: 0.5 * (-lp1[label] - lp2[label]); padded rows have an
    # all-zero one-hot and contribute exactly 0.
    loss_ref[...] = -0.5 * jnp.sum(oh_ref[...] * (lp1 + lp2),
                                   axis=-1, keepdims=True)


def fused_forward(feat1, feat2, onehot, params, n_pairs):
    """feat1/feat2: (N_pad, 2D) bf16; onehot: (N_pad, 2) f32; n_pairs = real N."""
    n_pad, two_d = feat1.shape
    tile_n = min(TILE_N_MAX, n_pad)
    assert n_pad % tile_n == 0 and tile_n % 8 == 0

    (w1a, b1a, w2a, b2a), (w1b, b1b, w2b, b2b) = params
    d_model = w1a.shape[1]

    # bf16 weights (hoisted cast: done once here, not per grid step), f32 biases.
    w1a = w1a.astype(jnp.bfloat16)
    w2a = w2a.astype(jnp.bfloat16)
    w1b = w1b.astype(jnp.bfloat16)
    w2b = w2b.astype(jnp.bfloat16)

    row_spec = lambda shape: pl.BlockSpec(shape, lambda i: (i, 0))
    const_spec = lambda shape: pl.BlockSpec(shape, lambda i: (0, 0))

    grid = (n_pad // tile_n,)

    # TODO(synk): on v7x, constant-index weight blocks could additionally use
    # pipeline_mode=pl.Buffered(1) / vmem_limit_bytes to trim resident VMEM;
    # bf16 weights already halve it, so it is left at defaults here.
    prob, loss_terms = pl.pallas_call(
        _fused_pair_kernel,
        out_shape=(jax.ShapeDtypeStruct((n_pad, 2), jnp.float32),
                   jax.ShapeDtypeStruct((n_pad, 1), jnp.float32)),
        grid=grid,
        in_specs=[
            row_spec((tile_n, two_d)),            # eos-pooled pair features (head 1)
            row_spec((tile_n, two_d)),            # CLS pair features        (head 2)
            row_spec((tile_n, 2)),                # one-hot labels
            const_spec((two_d, d_model)),         # w1a (VMEM-resident)
            const_spec((1, d_model)),             # b1a
            const_spec((d_model, 2)),             # w2a
            const_spec((1, 2)),                   # b2a
            const_spec((two_d, d_model)),         # w1b
            const_spec((1, d_model)),             # b1b
            const_spec((d_model, 2)),             # w2b
            const_spec((1, 2)),                   # b2b
        ],
        out_specs=(row_spec((tile_n, 2)),         # fused prob tile (dense)
                   row_spec((tile_n, 1))),        # per-pair CE tile (dense)
        compiler_params=pltpu.CompilerParams(
            dimension_semantics=("parallel",)),   # v7x: shard pair tiles over 2 TCs
    )(feat1, feat2, onehot,
      w1a, b1a, w2a, b2a, w1b, b1b, w2b, b2b)

    return prob[:n_pairs], loss_terms


# ----------------------------------------------------------------------------
# Model forward (glue): O(B*S) int reduce for the eos positions, an O(B*D)
# gather, padding to a tile multiple, and the final mean stay outside the
# kernel; everything else is fused in one pallas_call.  Fully jittable.
# ----------------------------------------------------------------------------
def model_forward(input_ids, dec_hidden_states, enc2_hidden_states, labels, params):
    # TODO(synk): encoder / encoder_2 (pretrained PLBART & CodeBERT transformers)
    # are external modules; their hidden states are supplied as inputs here.
    # TODO(synk): the original "same number of <eos> tokens" ValueError check is
    # dropped (it forces a device->host sync and is un-jittable); validate in
    # data prep instead.
    B, S = input_ids.shape
    D = dec_hidden_states.shape[-1]
    N = B // 2

    # last-<eos> position per row (rows without <eos> fall back to the last
    # position; data prep should guarantee at least one <eos> per row).
    pos = lax.broadcasted_iota(jnp.int32, (B, S), 1)
    last_idx = jnp.max(jnp.where(input_ids == EOS_TOKEN_ID, pos, -1), axis=1)
    last_idx = jnp.where(last_idx < 0, S - 1, last_idx).astype(jnp.int32)

    # Pre-gather: eos-pooled rows and CLS rows, then pair-concatenate to (N, 2D).
    pooled = dec_hidden_states[jnp.arange(B), last_idx, :]        # (B, D)
    cls = enc2_hidden_states[:, 0, :]                             # (B, D)
    feat1 = pooled.reshape(N, 2 * D).astype(jnp.bfloat16)
    feat2 = cls.reshape(N, 2 * D).astype(jnp.bfloat16)
    onehot = jax.nn.one_hot(labels.astype(jnp.int32), 2, dtype=jnp.float32)  # (N, 2)

    # Pad the pair dimension to a multiple of the tile (padded rows have an
    # all-zero one-hot -> zero CE contribution; their prob rows are sliced off).
    tile_n = min(TILE_N_MAX, _round_up(max(N, 1), 8))
    n_pad = _round_up(N, tile_n)
    if n_pad != N:
        pad = n_pad - N
        feat1 = jnp.pad(feat1, ((0, pad), (0, 0)))
        feat2 = jnp.pad(feat2, ((0, pad), (0, 0)))
        onehot = jnp.pad(onehot, ((0, pad), (0, 0)))

    prob, loss_terms = fused_forward(feat1, feat2, onehot, params, N)
    loss = jnp.sum(loss_terms) / N          # mean over real pairs of 0.5*(CE1+CE2)
    return loss, prob


# ----------------------------------------------------------------------------
# Deterministic parameter init (synthetic stand-in for the trained heads).
# nn.Linear(in, out) is realized as x @ W + b with W stored as (in, out).
# ----------------------------------------------------------------------------
def init_head_params(key, d_model):
    k1, k2, k3, k4 = jax.random.split(key, 4)
    w1 = 0.02 * jax.random.normal(k1, (2 * d_model, d_model), jnp.float32)
    b1 = 0.02 * jax.random.normal(k2, (1, d_model), jnp.float32)
    w2 = 0.02 * jax.random.normal(k3, (d_model, 2), jnp.float32)
    b2 = 0.02 * jax.random.normal(k4, (1, 2), jnp.float32)
    return (w1, b1, w2, b2)


def reference(input_ids, dec_h, enc2_h, labels, params):
    """Pure-JAX f32 reference for the same forward pass."""
    B, S = input_ids.shape
    D = dec_h.shape[-1]
    pos = jnp.arange(S)[None, :]
    last = jnp.max(jnp.where(input_ids == EOS_TOKEN_ID, pos, -1), axis=1)
    last = jnp.where(last < 0, S - 1, last)
    pooled = dec_h[jnp.arange(B), last, :]
    cls = enc2_h[:, 0, :]
    feat1 = pooled.reshape(-1, 2 * D)
    feat2 = cls.reshape(-1, 2 * D)

    def head(x, p):
        w1, b1, w2, b2 = p
        h = jnp.tanh(jnp.dot(x, w1, precision=lax.Precision.HIGHEST) + b1)
        return jnp.dot(h, w2, precision=lax.Precision.HIGHEST) + b2

    l1 = head(feat1, params[0])
    l2 = head(feat2, params[1])
    p1 = jax.nn.softmax(l1, axis=-1)
    p2 = jax.nn.softmax(l2, axis=-1)
    lp1 = jax.nn.log_softmax(l1, axis=-1)
    lp2 = jax.nn.log_softmax(l2, axis=-1)
    n = l1.shape[0]
    oh = jax.nn.one_hot(labels, 2, dtype=jnp.float32)
    loss = 0.5 * (-jnp.sum(oh * lp1) / n + -jnp.sum(oh * lp2) / n)
    return loss, 0.5 * (p1 + p2)


if __name__ == "__main__":
    # Small shapes: 4 pairs -> 8 sequences, block_size=16, d_model=128.
    N_PAIRS, S, D = 4, 16, 128
    B = 2 * N_PAIRS

    key = jax.random.PRNGKey(0)
    k_ids, k_dec, k_enc2, k_lab, k_h1, k_h2 = jax.random.split(key, 6)

    # Token ids in [3, 50) (avoid pad=1 / eos=2), then exactly one <eos> per row.
    ids = jax.random.randint(k_ids, (B, S), 3, 50, dtype=jnp.int32)
    rows = jnp.arange(B)
    eos_cols = 5 + (rows % (S - 6))
    input_ids = ids.at[rows, eos_cols].set(EOS_TOKEN_ID)

    dec_hidden = jax.random.normal(k_dec, (B, S, D), jnp.float32)    # decoder_hidden_states[-1]
    enc2_hidden = jax.random.normal(k_enc2, (B, S, D), jnp.float32)  # encoder_2(...)[0]
    labels = jax.random.randint(k_lab, (N_PAIRS,), 0, 2, dtype=jnp.int32)

    params = (init_head_params(k_h1, D), init_head_params(k_h2, D))

    fwd = jax.jit(model_forward)
    loss, fused_prob = fwd(input_ids, dec_hidden, enc2_hidden, labels, params)
    jax.block_until_ready((loss, fused_prob))

    loss_ref, prob_ref = reference(input_ids, dec_hidden, enc2_hidden, labels, params)
    assert np.allclose(np.asarray(fused_prob), np.asarray(prob_ref), atol=1e-2, rtol=1e-2)
    assert np.allclose(float(loss), float(loss_ref), atol=1e-2, rtol=1e-2)

    print("KERNEL_OK")
</pallas_src>

<mosaic_0001>
module attributes {stable_mosaic.version = 11 : i64} {
  func.func @_fused_pair_kernel(%arg0: i32, %arg1: memref<8x256xbf16, #tpu.memory_space<vmem>>, %arg2: memref<8x256xbf16, #tpu.memory_space<vmem>>, %arg3: memref<8x2xf32, #tpu.memory_space<vmem>>, %arg4: memref<256x128xbf16, #tpu.memory_space<vmem>>, %arg5: memref<1x128xf32, #tpu.memory_space<vmem>>, %arg6: memref<128x2xbf16, #tpu.memory_space<vmem>>, %arg7: memref<1x2xf32, #tpu.memory_space<vmem>>, %arg8: memref<256x128xbf16, #tpu.memory_space<vmem>>, %arg9: memref<1x128xf32, #tpu.memory_space<vmem>>, %arg10: memref<128x2xbf16, #tpu.memory_space<vmem>>, %arg11: memref<1x2xf32, #tpu.memory_space<vmem>>, %arg12: memref<8x2xf32, #tpu.memory_space<vmem>>, %arg13: memref<8x1xf32, #tpu.memory_space<vmem>>) attributes {dimension_semantics = [#tpu.dimension_semantics<parallel>], iteration_bounds = array<i64: 1>, scalar_prefetch = 0 : i64, scratch_operands = 0 : i64, tpu.core_type = #tpu.core_type<tc>, window_params = [{transform_indices = @transform_0, window_bounds = array<i64: 8, 256>}, {transform_indices = @transform_1, window_bounds = array<i64: 8, 256>}, {transform_indices = @transform_2, window_bounds = array<i64: 8, 2>}, {pipeline_mode = #tpu.pipeline_mode<synchronous>, transform_indices = @transform_3, window_bounds = array<i64: 256, 128>}, {pipeline_mode = #tpu.pipeline_mode<synchronous>, transform_indices = @transform_4, window_bounds = array<i64: 1, 128>}, {pipeline_mode = #tpu.pipeline_mode<synchronous>, transform_indices = @transform_5, window_bounds = array<i64: 128, 2>}, {pipeline_mode = #tpu.pipeline_mode<synchronous>, transform_indices = @transform_6, window_bounds = array<i64: 1, 2>}, {pipeline_mode = #tpu.pipeline_mode<synchronous>, transform_indices = @transform_7, window_bounds = array<i64: 256, 128>}, {pipeline_mode = #tpu.pipeline_mode<synchronous>, transform_indices = @transform_8, window_bounds = array<i64: 1, 128>}, {pipeline_mode = #tpu.pipeline_mode<synchronous>, transform_indices = @transform_9, window_bounds = array<i64: 128, 2>}, {pipeline_mode = #tpu.pipeline_mode<synchronous>, transform_indices = @transform_10, window_bounds = array<i64: 1, 2>}, {transform_indices = @transform_11, window_bounds = array<i64: 8, 2>}, {transform_indices = @transform_12, window_bounds = array<i64: 8, 1>}]} {
    %c0 = arith.constant 0 : index
    %c0_0 = arith.constant 0 : index
    %0 = vector.load %arg1[%c0, %c0_0] : memref<8x256xbf16, #tpu.memory_space<vmem>>, vector<8x256xbf16>
    %c0_1 = arith.constant 0 : index
    %c0_2 = arith.constant 0 : index
    %1 = vector.load %arg4[%c0_1, %c0_2] : memref<256x128xbf16, #tpu.memory_space<vmem>>, vector<256x128xbf16>
    %cst = arith.constant dense<0.000000e+00> : vector<8x128xf32>
    %2 = tpu.matmul %0, %1, %cst {dimension_numbers = #tpu.dot_dimension_numbers<[1], [0], [0], [1], [0, 0, 1, 1], [], []>} : vector<8x256xbf16>, vector<256x128xbf16>, vector<8x128xf32> -> vector<8x128xf32>
    %c0_3 = arith.constant 0 : index
    %c0_4 = arith.constant 0 : index
    %3 = vector.load %arg5[%c0_3, %c0_4] : memref<1x128xf32, #tpu.memory_space<vmem>>, vector<1x128xf32>
    %4 = vector.broadcast %3 : vector<1x128xf32> to vector<8x128xf32>
    %5 = arith.addf %2, %4 : vector<8x128xf32>
    %6 = math.tanh %5 : vector<8x128xf32>
    %7 = arith.truncf %6 : vector<8x128xf32> to vector<8x128xbf16>
    %c0_5 = arith.constant 0 : index
    %c0_6 = arith.constant 0 : index
    %8 = vector.load %arg6[%c0_5, %c0_6] : memref<128x2xbf16, #tpu.memory_space<vmem>>, vector<128x2xbf16>
    %cst_7 = arith.constant dense<0.000000e+00> : vector<8x2xf32>
    %9 = tpu.matmul %7, %8, %cst_7 {dimension_numbers = #tpu.dot_dimension_numbers<[1], [0], [0], [1], [0, 0, 1, 1], [], []>} : vector<8x128xbf16>, vector<128x2xbf16>, vector<8x2xf32> -> vector<8x2xf32>
    %c0_8 = arith.constant 0 : index
    %c0_9 = arith.constant 0 : index
    %10 = vector.load %arg7[%c0_8, %c0_9] : memref<1x2xf32, #tpu.memory_space<vmem>>, vector<1x2xf32>
    %11 = vector.broadcast %10 : vector<1x2xf32> to vector<8x2xf32>
    %12 = arith.addf %9, %11 : vector<8x2xf32>
    %cst_10 = arith.constant dense<0xFF800000> : vector<8xf32>
    %13 = vector.multi_reduction <maximumf>, %12, %cst_10 [1] : vector<8x2xf32> to vector<8xf32>
    %14 = vector.shape_cast %13 : vector<8xf32> to vector<8x1xf32>
    %15 = vector.broadcast %14 : vector<8x1xf32> to vector<8x2xf32>
    %16 = arith.subf %12, %15 : vector<8x2xf32>
    %17 = math.exp %16 : vector<8x2xf32>
    %cst_11 = arith.constant dense<0.000000e+00> : vector<8xf32>
    %18 = vector.multi_reduction <add>, %17, %cst_11 [1] : vector<8x2xf32> to vector<8xf32>
    %19 = vector.shape_cast %18 : vector<8xf32> to vector<8x1xf32>
    %20 = math.log %19 : vector<8x1xf32>
    %21 = vector.broadcast %20 : vector<8x1xf32> to vector<8x2xf32>
    %22 = arith.subf %16, %21 : vector<8x2xf32>
    %c0_12 = arith.constant 0 : index
    %c0_13 = arith.constant 0 : index
    %23 = vector.load %arg2[%c0_12, %c0_13] : memref<8x256xbf16, #tpu.memory_space<vmem>>, vector<8x256xbf16>
    %c0_14 = arith.constant 0 : index
    %c0_15 = arith.constant 0 : index
    %24 = vector.load %arg8[%c0_14, %c0_15] : memref<256x128xbf16, #tpu.memory_space<vmem>>, vector<256x128xbf16>
    %cst_16 = arith.constant dense<0.000000e+00> : vector<8x128xf32>
    %25 = tpu.matmul %23, %24, %cst_16 {dimension_numbers = #tpu.dot_dimension_numbers<[1], [0], [0], [1], [0, 0, 1, 1], [], []>} : vector<8x256xbf16>, vector<256x128xbf16>, vector<8x128xf32> -> vector<8x128xf32>
    %c0_17 = arith.constant 0 : index
    %c0_18 = arith.constant 0 : index
    %26 = vector.load %arg9[%c0_17, %c0_18] : memref<1x128xf32, #tpu.memory_space<vmem>>, vector<1x128xf32>
    %27 = vector.broadcast %26 : vector<1x128xf32> to vector<8x128xf32>
    %28 = arith.addf %25, %27 : vector<8x128xf32>
    %29 = math.tanh %28 : vector<8x128xf32>
    %30 = arith.truncf %29 : vector<8x128xf32> to vector<8x128xbf16>
    %c0_19 = arith.constant 0 : index
    %c0_20 = arith.constant 0 : index
    %31 = vector.load %arg10[%c0_19, %c0_20] : memref<128x2xbf16, #tpu.memory_space<vmem>>, vector<128x2xbf16>
    %cst_21 = arith.constant dense<0.000000e+00> : vector<8x2xf32>
    %32 = tpu.matmul %30, %31, %cst_21 {dimension_numbers = #tpu.dot_dimension_numbers<[1], [0], [0], [1], [0, 0, 1, 1], [], []>} : vector<8x128xbf16>, vector<128x2xbf16>, vector<8x2xf32> -> vector<8x2xf32>
    %c0_22 = arith.constant 0 : index
    %c0_23 = arith.constant 0 : index
    %33 = vector.load %arg11[%c0_22, %c0_23] : memref<1x2xf32, #tpu.memory_space<vmem>>, vector<1x2xf32>
    %34 = vector.broadcast %33 : vector<1x2xf32> to vector<8x2xf32>
    %35 = arith.addf %32, %34 : vector<8x2xf32>
    %cst_24 = arith.constant dense<0xFF800000> : vector<8xf32>
    %36 = vector.multi_reduction <maximumf>, %35, %cst_24 [1] : vector<8x2xf32> to vector<8xf32>
    %37 = vector.shape_cast %36 : vector<8xf32> to vector<8x1xf32>
    %38 = vector.broadcast %37 : vector<8x1xf32> to vector<8x2xf32>
    %39 = arith.subf %35, %38 : vector<8x2xf32>
    %40 = math.exp %39 : vector<8x2xf32>
    %cst_25 = arith.constant dense<0.000000e+00> : vector<8xf32>
    %41 = vector.multi_reduction <add>, %40, %cst_25 [1] : vector<8x2xf32> to vector<8xf32>
    %42 = vector.shape_cast %41 : vector<8xf32> to vector<8x1xf32>
    %43 = math.log %42 : vector<8x1xf32>
    %44 = vector.broadcast %43 : vector<8x1xf32> to vector<8x2xf32>
    %45 = arith.subf %39, %44 : vector<8x2xf32>
    %46 = math.exp %22 : vector<8x2xf32>
    %47 = math.exp %45 : vector<8x2xf32>
    %48 = arith.addf %46, %47 : vector<8x2xf32>
    %cst_26 = arith.constant 5.000000e-01 : f32
    %49 = vector.broadcast %cst_26 : f32 to vector<8x2xf32>
    %50 = arith.mulf %49, %48 : vector<8x2xf32>
    %c0_27 = arith.constant 0 : index
    %c0_28 = arith.constant 0 : index
    %51 = vector.load %arg12[%c0_27, %c0_28] : memref<8x2xf32, #tpu.memory_space<vmem>>, vector<8x2xf32>
    tpu.vector_store %arg12[%c0_27, %c0_28], %50 {strides = array<i32>} : memref<8x2xf32, #tpu.memory_space<vmem>>, vector<8x2xf32>,
    %c0_29 = arith.constant 0 : index
    %c0_30 = arith.constant 0 : index
    %52 = vector.load %arg3[%c0_29, %c0_30] : memref<8x2xf32, #tpu.memory_space<vmem>>, vector<8x2xf32>
    %53 = arith.addf %22, %45 : vector<8x2xf32>
    %54 = arith.mulf %52, %53 : vector<8x2xf32>
    %cst_31 = arith.constant dense<0.000000e+00> : vector<8xf32>
    %55 = vector.multi_reduction <add>, %54, %cst_31 [1] : vector<8x2xf32> to vector<8xf32>
    %56 = vector.shape_cast %55 : vector<8xf32> to vector<8x1xf32>
    %cst_32 = arith.constant -5.000000e-01 : f32
    %57 = vector.broadcast %cst_32 : f32 to vector<8x1xf32>
    %58 = arith.mulf %57, %56 : vector<8x1xf32>
    %c0_33 = arith.constant 0 : index
    %c0_34 = arith.constant 0 : index
    %59 = vector.load %arg13[%c0_33, %c0_34] : memref<8x1xf32, #tpu.memory_space<vmem>>, vector<8x1xf32>
    tpu.vector_store %arg13[%c0_33, %c0_34], %58 {strides = array<i32>} : memref<8x1xf32, #tpu.memory_space<vmem>>, vector<8x1xf32>,
    return
  }
  func.func @transform_0(%arg0: i32) -> (i32, i32) {
    %c0_i32 = arith.constant 0 : i32
    %c0_i32_0 = arith.constant 0 : i32
    return %arg0, %c0_i32 : i32, i32
  }
  func.func @transform_1(%arg0: i32) -> (i32, i32) {
    %c0_i32 = arith.constant 0 : i32
    %c0_i32_0 = arith.constant 0 : i32
    return %arg0, %c0_i32 : i32, i32
  }
  func.func @transform_2(%arg0: i32) -> (i32, i32) {
    %c0_i32 = arith.constant 0 : i32
    %c0_i32_0 = arith.constant 0 : i32
    return %arg0, %c0_i32 : i32, i32
  }
  func.func @transform_3(%arg0: i32) -> (i32, i32) {
    %c0_i32 = arith.constant 0 : i32
    %c0_i32_0 = arith.constant 0 : i32
    %c0_i32_1 = arith.constant 0 : i32
    return %c0_i32, %c0_i32_0 : i32, i32
  }
  func.func @transform_4(%arg0: i32) -> (i32, i32) {
    %c0_i32 = arith.constant 0 : i32
    %c0_i32_0 = arith.constant 0 : i32
    %c0_i32_1 = arith.constant 0 : i32
    return %c0_i32, %c0_i32_0 : i32, i32
  }
  func.func @transform_5(%arg0: i32) -> (i32, i32) {
    %c0_i32 = arith.constant 0 : i32
    %c0_i32_0 = arith.constant 0 : i32
    %c0_i32_1 = arith.constant 0 : i32
    return %c0_i32, %c0_i32_0 : i32, i32
  }
  func.func @transform_6(%arg0: i32) -> (i32, i32) {
    %c0_i32 = arith.constant 0 : i32
    %c0_i32_0 = arith.constant 0 : i32
    %c0_i32_1 = arith.constant 0 : i32
    return %c0_i32, %c0_i32_0 : i32, i32
  }
  func.func @transform_7(%arg0: i32) -> (i32, i32) {
    %c0_i32 = arith.constant 0 : i32
    %c0_i32_0 = arith.constant 0 : i32
    %c0_i32_1 = arith.constant 0 : i32
    return %c0_i32, %c0_i32_0 : i32, i32
  }
  func.func @transform_8(%arg0: i32) -> (i32, i32) {
    %c0_i32 = arith.constant 0 : i32
    %c0_i32_0 = arith.constant 0 : i32
    %c0_i32_1 = arith.constant 0 : i32
    return %c0_i32, %c0_i32_0 : i32, i32
  }
  func.func @transform_9(%arg0: i32) -> (i32, i32) {
    %c0_i32 = arith.constant 0 : i32
    %c0_i32_0 = arith.constant 0 : i32
    %c0_i32_1 = arith.constant 0 : i32
    return %c0_i32, %c0_i32_0 : i32, i32
  }
  func.func @transform_10(%arg0: i32) -> (i32, i32) {
    %c0_i32 = arith.constant 0 : i32
    %c0_i32_0 = arith.constant 0 : i32
    %c0_i32_1 = arith.constant 0 : i32
    return %c0_i32, %c0_i32_0 : i32, i32
  }
  func.func @transform_11(%arg0: i32) -> (i32, i32) {
    %c0_i32 = arith.constant 0 : i32
    %c0_i32_0 = arith.constant 0 : i32
    return %arg0, %c0_i32 : i32, i32
  }
  func.func @transform_12(%arg0: i32) -> (i32, i32) {
    %c0_i32 = arith.constant 0 : i32
    %c0_i32_0 = arith.constant 0 : i32
    return %arg0, %c0_i32 : i32, i32
  }
}

</mosaic_0001>

<llo_original>
// kernel: model_forward.1
$region0: #{model_forward.1}
  #allocation0 [shape = 'u32[]', space=smem, size = 0x4, offset = 0x4, fixed_abs, tag = 'smem constant byte address 0x4 - core index']
  #allocation1 [shape = 'u32[144,128]{1,0:T(1,128)}', space=vmem, size = 0x12000, scoped, tag = 'internal scratch']
  %s0 = inlined_call_operand.vmem [shape: bf16[8,256], index: 0, kind: input, shape index: {}]
  %s1 = inlined_call_operand.vmem [shape: bf16[8,256], index: 1, kind: input, shape index: {}]
  %s2 = inlined_call_operand.vmem [shape: f32[8,2], index: 2, kind: input, shape index: {}]
  %s3 = inlined_call_operand.vmem [shape: bf16[256,128], index: 3, kind: input, shape index: {}]
  %s4 = inlined_call_operand.vmem [shape: f32[1,128], index: 4, kind: input, shape index: {}]
  %s5 = inlined_call_operand.vmem [shape: bf16[128,2], index: 5, kind: input, shape index: {}]
  %s6 = inlined_call_operand.vmem [shape: f32[1,2], index: 6, kind: input, shape index: {}]
  %s7 = inlined_call_operand.vmem [shape: bf16[256,128], index: 7, kind: input, shape index: {}]
  %s8 = inlined_call_operand.vmem [shape: f32[1,128], index: 8, kind: input, shape index: {}]
  %s9 = inlined_call_operand.vmem [shape: bf16[128,2], index: 9, kind: input, shape index: {}]
  %s10 = inlined_call_operand.vmem [shape: f32[1,2], index: 10, kind: input, shape index: {}]
  %s11 = inlined_call_operand.vmem [shape: f32[8,2], index: 11, kind: output, shape index: {0}]
  %s12 = inlined_call_operand.vmem [shape: f32[8,1], index: 12, kind: output, shape index: {1}]
  %13 = xla_tuple %s11, %s12
  %s14 = sld [smem:[#allocation0]]
  $region62: #{model_forward.1} parent=0
    _
  %s16 = ssub.s32 1, %s14
  %s17 = scalar_select 0, %s16, %s14
  // Predicated region
  $region2: #{model_forward.1} parent=0 // pred_check
    _
  $region3: #{model_forward.1} parent=0 // pred_check_branch
    %19 = sbr.rel (0) target = $region5
  $region4: #{model_forward.1} parent=0 // pred_region
    _
  $region5: #{model_forward.1} parent=0 // pred_fallthru
    _
  // Predicated region
  $region6: #{model_forward.1} parent=0 // pred_check
    _
  $region7: #{model_forward.1} parent=0 // pred_check_branch
    %21 = sbr.rel (0) target = $region9
  $region8: #{model_forward.1} parent=0 // pred_region
    _
  $region9: #{model_forward.1} parent=0 // pred_fallthru
    _
  // Predicated region
  $region10: #{model_forward.1} parent=0 // pred_check
    _
  $region11: #{model_forward.1} parent=0 // pred_check_branch
    %23 = sbr.rel (0) target = $region13
  $region12: #{model_forward.1} parent=0 // pred_region
    _
  $region13: #{model_forward.1} parent=0 // pred_fallthru
    _
  // Predicated region
  $region14: #{model_forward.1} parent=0 // pred_check
    _
  $region15: #{model_forward.1} parent=0 // pred_check_branch
    %25 = sbr.rel (0) target = $region17
  $region16: #{model_forward.1} parent=0 // pred_region
    _
  $region17: #{model_forward.1} parent=0 // pred_fallthru
    _
  // Predicated region
  $region18: #{model_forward.1} parent=0 // pred_check
    _
  $region19: #{model_forward.1} parent=0 // pred_check_branch
    %27 = sbr.rel (0) target = $region21
  $region20: #{model_forward.1} parent=0 // pred_region
    _
  $region21: #{model_forward.1} parent=0 // pred_fallthru
    _
  // Predicated region
  $region22: #{model_forward.1} parent=0 // pred_check
    _
  $region23: #{model_forward.1} parent=0 // pred_check_branch
    %29 = sbr.rel (0) target = $region25
  $region24: #{model_forward.1} parent=0 // pred_region
    _
  $region25: #{model_forward.1} parent=0 // pred_fallthru
    _
  // Predicated region
  $region26: #{model_forward.1} parent=0 // pred_check
    _
  $region27: #{model_forward.1} parent=0 // pred_check_branch
    %31 = sbr.rel (0) target = $region29
  $region28: #{model_forward.1} parent=0 // pred_region
    _
  $region29: #{model_forward.1} parent=0 // pred_fallthru
    _
  // Predicated region
  $region30: #{model_forward.1} parent=0 // pred_check
    _
  $region31: #{model_forward.1} parent=0 // pred_check_branch
    %33 = sbr.rel (0) target = $region33
  $region32: #{model_forward.1} parent=0 // pred_region
    _
  $region33: #{model_forward.1} parent=0 // pred_fallthru
    _
  // Predicated region
  $region34: #{model_forward.1} parent=0 // pred_check
    _
  $region35: #{model_forward.1} parent=0 // pred_check_branch
    %35 = sbr.rel (0) target = $region37
  $region36: #{model_forward.1} parent=0 // pred_region
    _
  $region37: #{model_forward.1} parent=0 // pred_fallthru
    _
  // Predicated region
  $region38: #{model_forward.1} parent=0 // pred_check
    _
  $region39: #{model_forward.1} parent=0 // pred_check_branch
    %37 = sbr.rel (0) target = $region41
  $region40: #{model_forward.1} parent=0 // pred_region
    _
  $region41: #{model_forward.1} parent=0 // pred_fallthru
    _
  // Predicated region
  $region42: #{model_forward.1} parent=0 // pred_check
    _
  $region43: #{model_forward.1} parent=0 // pred_check_branch
    %39 = sbr.rel (0) target = $region45
  $region44: #{model_forward.1} parent=0 // pred_region
    _
  $region45: #{model_forward.1} parent=0 // pred_fallthru
    _
  %v41 = vld [vmem:[%s0] sm:$0xff]
  %v42 = vld [vmem:[%s3] sm:$0xf]
  %v43 = vld [vmem:[%s3 + $0x4] sm:$0xf]
  %v44 = vld [vmem:[%s3 + $0x8] sm:$0xf]
  %v45 = vld [vmem:[%s3 + $0xc] sm:$0xf]
  %v46 = vld [vmem:[%s3 + $0x10] sm:$0xf]
  %v47 = vld [vmem:[%s3 + $0x14] sm:$0xf]
  %v48 = vld [vmem:[%s3 + $0x18] sm:$0xf]
  %v49 = vld [vmem:[%s3 + $0x1c] sm:$0xf]
  %v50 = vld [vmem:[%s3 + $0x20] sm:$0xf]
  %v51 = vld [vmem:[%s3 + $0x24] sm:$0xf]
  %v52 = vld [vmem:[%s3 + $0x28] sm:$0xf]
  %v53 = vld [vmem:[%s3 + $0x2c] sm:$0xf]
  %v54 = vld [vmem:[%s3 + $0x30] sm:$0xf]
  %v55 = vld [vmem:[%s3 + $0x34] sm:$0xf]
  %v56 = vld [vmem:[%s3 + $0x38] sm:$0xf]
  %v57 = vld [vmem:[%s3 + $0x3c] sm:$0xf]
  %v58 = vld [vmem:[%s3 + $0x40] sm:$0xf]
  %v59 = vld [vmem:[%s3 + $0x44] sm:$0xf]
  %v60 = vld [vmem:[%s3 + $0x48] sm:$0xf]
  %v61 = vld [vmem:[%s3 + $0x4c] sm:$0xf]
  %v62 = vld [vmem:[%s3 + $0x50] sm:$0xf]
  %v63 = vld [vmem:[%s3 + $0x54] sm:$0xf]
  %v64 = vld [vmem:[%s3 + $0x58] sm:$0xf]
  %v65 = vld [vmem:[%s3 + $0x5c] sm:$0xf]
  %v66 = vld [vmem:[%s3 + $0x60] sm:$0xf]
  %v67 = vld [vmem:[%s3 + $0x64] sm:$0xf]
  %v68 = vld [vmem:[%s3 + $0x68] sm:$0xf]
  %v69 = vld [vmem:[%s3 + $0x6c] sm:$0xf]
  %v70 = vld [vmem:[%s3 + $0x70] sm:$0xf]
  %v71 = vld [vmem:[%s3 + $0x74] sm:$0xf]
  %v72 = vld [vmem:[%s3 + $0x78] sm:$0xf]
  %v73 = vld [vmem:[%s3 + $0x7c] sm:$0xf]
  %v74 = vld [vmem:[%s4] sm:$0x1]
  %v76 = vlaneseq
  %v77 = vshrl.u32 %v76, 7
  %v78 = vsub.s32 0, %v77
  %v79 = vrot.slane %v74, %v78
  %v82 = vunpack.c.l.b16 %v41
  %v83 = vunpack.c.h.b16 %v41
  %v84 = vpack.c.b16 %v82, %v82
  %v85 = vpack.c.b16 %v83, %v83
  %v120 = vunpack.c.l.b16 %v42
  %v121 = vunpack.c.l.b16 %v43
  %v122 = vunpack.c.l.b16 %v44
  %v123 = vunpack.c.l.b16 %v45
  %v124 = vunpack.c.l.b16 %v46
  %v125 = vunpack.c.l.b16 %v47
  %v126 = vunpack.c.l.b16 %v48
  %v127 = vunpack.c.l.b16 %v49
  %v128 = vunpack.c.l.b16 %v50
  %v129 = vunpack.c.l.b16 %v51
  %v130 = vunpack.c.l.b16 %v52
  %v131 = vunpack.c.l.b16 %v53
  %v132 = vunpack.c.l.b16 %v54
  %v133 = vunpack.c.l.b16 %v55
  %v134 = vunpack.c.l.b16 %v56
  %v135 = vunpack.c.l.b16 %v57
  %v136 = vunpack.c.l.b16 %v58
  %v137 = vunpack.c.l.b16 %v59
  %v138 = vunpack.c.l.b16 %v60
  %v139 = vunpack.c.l.b16 %v61
  %v140 = vunpack.c.l.b16 %v62
  %v141 = vunpack.c.l.b16 %v63
  %v142 = vunpack.c.l.b16 %v64
  %v143 = vunpack.c.l.b16 %v65
  %v144 = vunpack.c.l.b16 %v66
  %v145 = vunpack.c.l.b16 %v67
  %v146 = vunpack.c.l.b16 %v68
  %v147 = vunpack.c.l.b16 %v69
  %v148 = vunpack.c.l.b16 %v70
  %v149 = vunpack.c.l.b16 %v71
  %v150 = vunpack.c.l.b16 %v72
  %v151 = vunpack.c.l.b16 %v73
  %v152 = vpack.c.b16 %v121, %v120
  %v153 = vpack.c.b16 %v123, %v122
  %v154 = vpack.c.b16 %v125, %v124
  %v155 = vpack.c.b16 %v127, %v126
  %v156 = vpack.c.b16 %v129, %v128
  %v157 = vpack.c.b16 %v131, %v130
  %v158 = vpack.c.b16 %v133, %v132
  %v159 = vpack.c.b16 %v135, %v134
  %v160 = vpack.c.b16 %v137, %v136
  %v161 = vpack.c.b16 %v139, %v138
  %v162 = vpack.c.b16 %v141, %v140
  %v163 = vpack.c.b16 %v143, %v142
  %v164 = vpack.c.b16 %v145, %v144
  %v165 = vpack.c.b16 %v147, %v146
  %v166 = vpack.c.b16 %v149, %v148
  %v167 = vpack.c.b16 %v151, %v150
  %184 = vmatprep.subr.bf16.mxu0 0
  %185 = vmatpush1.bf16.msra.mxu0 %v159
  %186 = vmatprep.subr.bf16.mxu0 0
  %187 = vmatpush1.bf16.msra.mxu0 %v158
  %188 = vmatprep.subr.bf16.mxu0 0
  %189 = vmatpush1.bf16.msra.mxu0 %v157
  %190 = vmatprep.subr.bf16.mxu0 0
  %191 = vmatpush1.bf16.msra.mxu0 %v156
  %192 = vmatprep.subr.bf16.mxu0 0
  %193 = vmatpush1.bf16.msra.mxu0 %v155
  %194 = vmatprep.subr.bf16.mxu0 0
  %195 = vmatpush1.bf16.msra.mxu0 %v154
  %196 = vmatprep.subr.bf16.mxu0 0
  %197 = vmatpush1.bf16.msra.mxu0 %v153
  %198 = vmatprep.subr.bf16.mxu0 0
  %199 = vmatpush1.bf16.msra.mxu0 %v152
  %200 = vmatprep.subr.bf16.mxu0 0
  %201 = vmatpush2.bf16.msra.mxu0 %v167
  %202 = vmatprep.subr.bf16.mxu0 0
  %203 = vmatpush2.bf16.msra.mxu0 %v166
  %204 = vmatprep.subr.bf16.mxu0 0
  %205 = vmatpush2.bf16.msra.mxu0 %v165
  %206 = vmatprep.subr.bf16.mxu0 0
  %207 = vmatpush2.bf16.msra.mxu0 %v164
  %208 = vmatprep.subr.bf16.mxu0 0
  %209 = vmatpush2.bf16.msra.mxu0 %v163
  %210 = vmatprep.subr.bf16.mxu0 0
  %211 = vmatpush2.bf16.msra.mxu0 %v162
  %212 = vmatprep.subr.bf16.mxu0 0
  %213 = vmatpush2.bf16.msra.mxu0 %v161
  %214 = vmatprep.subr.bf16.mxu0 0
  %215 = vmatpush2.bf16.msra.mxu0 %v160
  %216 = vmatprep.mubr.bf16.mxu0 %v85
  %217 = vmatmul.mubr.bf16.gmra.mxu0 %v84
  %v218 = vpop.f32.mrf.mxu0
  %v219 = vadd.f32 %v79, %v218
  %v220 = vpop.f32.mrf.mxu0
  %v221 = vpop.f32.mrf.mxu0
  %v222 = vpop.f32.mrf.mxu0
  %223 = vdwg.mxu0
  %v224 = vtanh.pop %v219
  %v225 = vpack.c.bf16 %v224, %v224
  %v226 = vld [vmem:[%s5] sm:$0xf]
  %v227 = vld [vmem:[%s5 + $0x4] sm:$0xf]
  %v228 = vld [vmem:[%s5 + $0x8] sm:$0xf]
  %v229 = vld [vmem:[%s5 + $0xc] sm:$0xf]
  %v230 = vld [vmem:[%s5 + $0x10] sm:$0xf]
  %v231 = vld [vmem:[%s5 + $0x14] sm:$0xf]
  %v232 = vld [vmem:[%s5 + $0x18] sm:$0xf]
  %v233 = vld [vmem:[%s5 + $0x1c] sm:$0xf]
  %v234 = vld [vmem:[%s5 + $0x20] sm:$0xf]
  %v235 = vld [vmem:[%s5 + $0x24] sm:$0xf]
  %v236 = vld [vmem:[%s5 + $0x28] sm:$0xf]
  %v237 = vld [vmem:[%s5 + $0x2c] sm:$0xf]
  %v238 = vld [vmem:[%s5 + $0x30] sm:$0xf]
  %v239 = vld [vmem:[%s5 + $0x34] sm:$0xf]
  %v240 = vld [vmem:[%s5 + $0x38] sm:$0xf]
  %v241 = vld [vmem:[%s5 + $0x3c] sm:$0xf]
  %v242 = vld [vmem:[%s6] sm:$0x1]
  %v244 = vlaneseq
  %v245 = vshrl.u32 %v244, 7
  %v246 = vsub.s32 0, %v245
  %v247 = vrot.slane %v242, %v246
  %v265 = vunpack.c.l.b16 %v226
  %v266 = vunpack.c.l.b16 %v227
  %v267 = vunpack.c.l.b16 %v228
  %v268 = vunpack.c.l.b16 %v229
  %v269 = vunpack.c.l.b16 %v230
  %v270 = vunpack.c.l.b16 %v231
  %v271 = vunpack.c.l.b16 %v232
  %v272 = vunpack.c.l.b16 %v233
  %v273 = vunpack.c.l.b16 %v234
  %v274 = vunpack.c.l.b16 %v235
  %v275 = vunpack.c.l.b16 %v236
  %v276 = vunpack.c.l.b16 %v237
  %v277 = vunpack.c.l.b16 %v238
  %v278 = vunpack.c.l.b16 %v239
  %v279 = vunpack.c.l.b16 %v240
  %v280 = vunpack.c.l.b16 %v241
  %v281 = vpack.c.b16 %v266, %v265
  %v282 = vpack.c.b16 %v268, %v267
  %v283 = vpack.c.b16 %v270, %v269
  %v284 = vpack.c.b16 %v272, %v271
  %v285 = vpack.c.b16 %v274, %v273
  %v286 = vpack.c.b16 %v276, %v275
  %v287 = vpack.c.b16 %v278, %v277
  %v288 = vpack.c.b16 %v280, %v279
  %297 = vmatprep.subr.bf16.mxu0 0
  %298 = vmatpush1.bf16.msra.mxu0 %v288
  %299 = vmatprep.subr.bf16.mxu0 0
  %300 = vmatpush1.bf16.msra.mxu0 %v287
  %301 = vmatprep.subr.bf16.mxu0 0
  %302 = vmatpush1.bf16.msra.mxu0 %v286
  %303 = vmatprep.subr.bf16.mxu0 0
  %304 = vmatpush1.bf16.msra.mxu0 %v285
  %305 = vmatprep.subr.bf16.mxu0 0
  %306 = vmatpush1.bf16.msra.mxu0 %v284
  %307 = vmatprep.subr.bf16.mxu0 0
  %308 = vmatpush1.bf16.msra.mxu0 %v283
  %309 = vmatprep.subr.bf16.mxu0 0
  %310 = vmatpush1.bf16.msra.mxu0 %v282
  %311 = vmatprep.subr.bf16.mxu0 0
  %312 = vmatpush1.bf16.msra.mxu0 %v281
  %313 = vmatprep.subr.bf16.mxu0 0
  %314 = vmatpush2.bf16.msra.mxu0 0
  %315 = vmatprep.subr.bf16.mxu0 0
  %316 = vmatpush2.bf16.msra.mxu0 0
  %317 = vmatprep.subr.bf16.mxu0 0
  %318 = vmatpush2.bf16.msra.mxu0 0
  %319 = vmatprep.subr.bf16.mxu0 0
  %320 = vmatpush2.bf16.msra.mxu0 0
  %321 = vmatprep.subr.bf16.mxu0 0
  %322 = vmatpush2.bf16.msra.mxu0 0
  %323 = vmatprep.subr.bf16.mxu0 0
  %324 = vmatpush2.bf16.msra.mxu0 0
  %325 = vmatprep.subr.bf16.mxu0 0
  %326 = vmatpush2.bf16.msra.mxu0 0
  %327 = vmatprep.subr.bf16.mxu0 0
  %328 = vmatpush2.bf16.msra.mxu0 0
  %329 = vmatprep.mubr.bf16.mxu0 0
  %330 = vmatmul.mubr.bf16.gmra.mxu0 %v225
  %v331 = vpop.f32.mrf.mxu0
  %v332 = vadd.f32 %v247, %v331
  %v333 = vpop.f32.mrf.mxu0
  %v334 = vpop.f32.mrf.mxu0
  %v335 = vpop.f32.mrf.mxu0
  %336 = vdwg.mxu0
  %vm337 = vcmask 15360
  %v338 = vsel %vm337, %v332, -inf
  %339 = vmax.xlane.f32.xlu0 %v338
  %v340 = vpop.xlane.xlu0 %339
  %v341 = vsub.f32 %v332, %v340
  %v342 = vmul.f32 %v341, 1.442695
  %v343 = vpow.pop %v342
  %v344 = vsel %vm337, %v343, 0.0
  %345 = vadd.xlane.f32.xlu0 %v344
  %v346 = vpop.xlane.xlu0 %345
  %v347 = vlog2.pop %v346
  %v348 = vmul.f32 %v347, 0.6931472
  %v349 = vsub.f32 %v341, %v348
  %v350 = vld [vmem:[%s1] sm:$0xff]
  %v351 = vld [vmem:[%s7] sm:$0xf]
  %v352 = vld [vmem:[%s7 + $0x4] sm:$0xf]
  %v353 = vld [vmem:[%s7 + $0x8] sm:$0xf]
  %v354 = vld [vmem:[%s7 + $0xc] sm:$0xf]
  %v355 = vld [vmem:[%s7 + $0x10] sm:$0xf]
  %v356 = vld [vmem:[%s7 + $0x14] sm:$0xf]
  %v357 = vld [vmem:[%s7 + $0x18] sm:$0xf]
  %v358 = vld [vmem:[%s7 + $0x1c] sm:$0xf]
  %v359 = vld [vmem:[%s7 + $0x20] sm:$0xf]
  %v360 = vld [vmem:[%s7 + $0x24] sm:$0xf]
  %v361 = vld [vmem:[%s7 + $0x28] sm:$0xf]
  %v362 = vld [vmem:[%s7 + $0x2c] sm:$0xf]
  %v363 = vld [vmem:[%s7 + $0x30] sm:$0xf]
  %v364 = vld [vmem:[%s7 + $0x34] sm:$0xf]
  %v365 = vld [vmem:[%s7 + $0x38] sm:$0xf]
  %v366 = vld [vmem:[%s7 + $0x3c] sm:$0xf]
  %v367 = vld [vmem:[%s7 + $0x40] sm:$0xf]
  %v368 = vld [vmem:[%s7 + $0x44] sm:$0xf]
  %v369 = vld [vmem:[%s7 + $0x48] sm:$0xf]
  %v370 = vld [vmem:[%s7 + $0x4c] sm:$0xf]
  %v371 = vld [vmem:[%s7 + $0x50] sm:$0xf]
  %v372 = vld [vmem:[%s7 + $0x54] sm:$0xf]
  %v373 = vld [vmem:[%s7 + $0x58] sm:$0xf]
  %v374 = vld [vmem:[%s7 + $0x5c] sm:$0xf]
  %v375 = vld [vmem:[%s7 + $0x60] sm:$0xf]
  %v376 = vld [vmem:[%s7 + $0x64] sm:$0xf]
  %v377 = vld [vmem:[%s7 + $0x68] sm:$0xf]
  %v378 = vld [vmem:[%s7 + $0x6c] sm:$0xf]
  %v379 = vld [vmem:[%s7 + $0x70] sm:$0xf]
  %v380 = vld [vmem:[%s7 + $0x74] sm:$0xf]
  %v381 = vld [vmem:[%s7 + $0x78] sm:$0xf]
  %v382 = vld [vmem:[%s7 + $0x7c] sm:$0xf]
  %v383 = vld [vmem:[%s8] sm:$0x1]
  %v385 = vlaneseq
  %v386 = vshrl.u32 %v385, 7
  %v387 = vsub.s32 0, %v386
  %v388 = vrot.slane %v383, %v387
  %v391 = vunpack.c.l.b16 %v350
  %v392 = vunpack.c.h.b16 %v350
  %v393 = vpack.c.b16 %v391, %v391
  %v394 = vpack.c.b16 %v392, %v392
  %v429 = vunpack.c.l.b16 %v351
  %v430 = vunpack.c.l.b16 %v352
  %v431 = vunpack.c.l.b16 %v353
  %v432 = vunpack.c.l.b16 %v354
  %v433 = vunpack.c.l.b16 %v355
  %v434 = vunpack.c.l.b16 %v356
  %v435 = vunpack.c.l.b16 %v357
  %v436 = vunpack.c.l.b16 %v358
  %v437 = vunpack.c.l.b16 %v359
  %v438 = vunpack.c.l.b16 %v360
  %v439 = vunpack.c.l.b16 %v361
  %v440 = vunpack.c.l.b16 %v362
  %v441 = vunpack.c.l.b16 %v363
  %v442 = vunpack.c.l.b16 %v364
  %v443 = vunpack.c.l.b16 %v365
  %v444 = vunpack.c.l.b16 %v366
  %v445 = vunpack.c.l.b16 %v367
  %v446 = vunpack.c.l.b16 %v368
  %v447 = vunpack.c.l.b16 %v369
  %v448 = vunpack.c.l.b16 %v370
  %v449 = vunpack.c.l.b16 %v371
  %v450 = vunpack.c.l.b16 %v372
  %v451 = vunpack.c.l.b16 %v373
  %v452 = vunpack.c.l.b16 %v374
  %v453 = vunpack.c.l.b16 %v375
  %v454 = vunpack.c.l.b16 %v376
  %v455 = vunpack.c.l.b16 %v377
  %v456 = vunpack.c.l.b16 %v378
  %v457 = vunpack.c.l.b16 %v379
  %v458 = vunpack.c.l.b16 %v380
  %v459 = vunpack.c.l.b16 %v381
  %v460 = vunpack.c.l.b16 %v382
  %v461 = vpack.c.b16 %v430, %v429
  %v462 = vpack.c.b16 %v432, %v431
  %v463 = vpack.c.b16 %v434, %v433
  %v464 = vpack.c.b16 %v436, %v435
  %v465 = vpack.c.b16 %v438, %v437
  %v466 = vpack.c.b16 %v440, %v439
  %v467 = vpack.c.b16 %v442, %v441
  %v468 = vpack.c.b16 %v444, %v443
  %v469 = vpack.c.b16 %v446, %v445
  %v470 = vpack.c.b16 %v448, %v447
  %v471 = vpack.c.b16 %v450, %v449
  %v472 = vpack.c.b16 %v452, %v451
  %v473 = vpack.c.b16 %v454, %v453
  %v474 = vpack.c.b16 %v456, %v455
  %v475 = vpack.c.b16 %v458, %v457
  %v476 = vpack.c.b16 %v460, %v459
  %493 = vmatprep.subr.bf16.mxu0 0
  %494 = vmatpush1.bf16.msra.mxu0 %v468
  %495 = vmatprep.subr.bf16.mxu0 0
  %496 = vmatpush1.bf16.msra.mxu0 %v467
  %497 = vmatprep.subr.bf16.mxu0 0
  %498 = vmatpush1.bf16.msra.mxu0 %v466
  %499 = vmatprep.subr.bf16.mxu0 0
  %500 = vmatpush1.bf16.msra.mxu0 %v465
  %501 = vmatprep.subr.bf16.mxu0 0
  %502 = vmatpush1.bf16.msra.mxu0 %v464
  %503 = vmatprep.subr.bf16.mxu0 0
  %504 = vmatpush1.bf16.msra.mxu0 %v463
  %505 = vmatprep.subr.bf16.mxu0 0
  %506 = vmatpush1.bf16.msra.mxu0 %v462
  %507 = vmatprep.subr.bf16.mxu0 0
  %508 = vmatpush1.bf16.msra.mxu0 %v461
  %509 = vmatprep.subr.bf16.mxu0 0
  %510 = vmatpush2.bf16.msra.mxu0 %v476
  %511 = vmatprep.subr.bf16.mxu0 0
  %512 = vmatpush2.bf16.msra.mxu0 %v475
  %513 = vmatprep.subr.bf16.mxu0 0
  %514 = vmatpush2.bf16.msra.mxu0 %v474
  %515 = vmatprep.subr.bf16.mxu0 0
  %516 = vmatpush2.bf16.msra.mxu0 %v473
  %517 = vmatprep.subr.bf16.mxu0 0
  %518 = vmatpush2.bf16.msra.mxu0 %v472
  %519 = vmatprep.subr.bf16.mxu0 0
  %520 = vmatpush2.bf16.msra.mxu0 %v471
  %521 = vmatprep.subr.bf16.mxu0 0
  %522 = vmatpush2.bf16.msra.mxu0 %v470
  %523 = vmatprep.subr.bf16.mxu0 0
  %524 = vmatpush2.bf16.msra.mxu0 %v469
  %525 = vmatprep.mubr.bf16.mxu0 %v394
  %526 = vmatmul.mubr.bf16.gmra.mxu0 %v393
  %v527 = vpop.f32.mrf.mxu0
  %v528 = vadd.f32 %v388, %v527
  %v529 = vpop.f32.mrf.mxu0
  %v530 = vpop.f32.mrf.mxu0
  %v531 = vpop.f32.mrf.mxu0
  %532 = vdwg.mxu0
  %v533 = vtanh.pop %v528
  %v534 = vpack.c.bf16 %v533, %v533
  %v535 = vld [vmem:[%s9] sm:$0xf]
  %v536 = vld [vmem:[%s9 + $0x4] sm:$0xf]
  %v537 = vld [vmem:[%s9 + $0x8] sm:$0xf]
  %v538 = vld [vmem:[%s9 + $0xc] sm:$0xf]
  %v539 = vld [vmem:[%s9 + $0x10] sm:$0xf]
  %v540 = vld [vmem:[%s9 + $0x14] sm:$0xf]
  %v541 = vld [vmem:[%s9 + $0x18] sm:$0xf]
  %v542 = vld [vmem:[%s9 + $0x1c] sm:$0xf]
  %v543 = vld [vmem:[%s9 + $0x20] sm:$0xf]
  %v544 = vld [vmem:[%s9 + $0x24] sm:$0xf]
  %v545 = vld [vmem:[%s9 + $0x28] sm:$0xf]
  %v546 = vld [vmem:[%s9 + $0x2c] sm:$0xf]
  %v547 = vld [vmem:[%s9 + $0x30] sm:$0xf]
  %v548 = vld [vmem:[%s9 + $0x34] sm:$0xf]
  %v549 = vld [vmem:[%s9 + $0x38] sm:$0xf]
  %v550 = vld [vmem:[%s9 + $0x3c] sm:$0xf]
  %v551 = vld [vmem:[%s10] sm:$0x1]
  %v553 = vlaneseq
  %v554 = vshrl.u32 %v553, 7
  %v555 = vsub.s32 0, %v554
  %v556 = vrot.slane %v551, %v555
  %v574 = vunpack.c.l.b16 %v535
  %v575 = vunpack.c.l.b16 %v536
  %v576 = vunpack.c.l.b16 %v537
  %v577 = vunpack.c.l.b16 %v538
  %v578 = vunpack.c.l.b16 %v539
  %v579 = vunpack.c.l.b16 %v540
  %v580 = vunpack.c.l.b16 %v541
  %v581 = vunpack.c.l.b16 %v542
  %v582 = vunpack.c.l.b16 %v543
  %v583 = vunpack.c.l.b16 %v544
  %v584 = vunpack.c.l.b16 %v545
  %v585 = vunpack.c.l.b16 %v546
  %v586 = vunpack.c.l.b16 %v547
  %v587 = vunpack.c.l.b16 %v548
  %v588 = vunpack.c.l.b16 %v549
  %v589 = vunpack.c.l.b16 %v550
  %v590 = vpack.c.b16 %v575, %v574
  %v591 = vpack.c.b16 %v577, %v576
  %v592 = vpack.c.b16 %v579, %v578
  %v593 = vpack.c.b16 %v581, %v580
  %v594 = vpack.c.b16 %v583, %v582
  %v595 = vpack.c.b16 %v585, %v584
  %v596 = vpack.c.b16 %v587, %v586
  %v597 = vpack.c.b16 %v589, %v588
  %606 = vmatprep.subr.bf16.mxu0 0
  %607 = vmatpush1.bf16.msra.mxu0 %v597
  %608 = vmatprep.subr.bf16.mxu0 0
  %609 = vmatpush1.bf16.msra.mxu0 %v596
  %610 = vmatprep.subr.bf16.mxu0 0
  %611 = vmatpush1.bf16.msra.mxu0 %v595
  %612 = vmatprep.subr.bf16.mxu0 0
  %613 = vmatpush1.bf16.msra.mxu0 %v594
  %614 = vmatprep.subr.bf16.mxu0 0
  %615 = vmatpush1.bf16.msra.mxu0 %v593
  %616 = vmatprep.subr.bf16.mxu0 0
  %617 = vmatpush1.bf16.msra.mxu0 %v592
  %618 = vmatprep.subr.bf16.mxu0 0
  %619 = vmatpush1.bf16.msra.mxu0 %v591
  %620 = vmatprep.subr.bf16.mxu0 0
  %621 = vmatpush1.bf16.msra.mxu0 %v590
  %622 = vmatprep.subr.bf16.mxu0 0
  %623 = vmatpush2.bf16.msra.mxu0 0
  %624 = vmatprep.subr.bf16.mxu0 0
  %625 = vmatpush2.bf16.msra.mxu0 0
  %626 = vmatprep.subr.bf16.mxu0 0
  %627 = vmatpush2.bf16.msra.mxu0 0
  %628 = vmatprep.subr.bf16.mxu0 0
  %629 = vmatpush2.bf16.msra.mxu0 0
  %630 = vmatprep.subr.bf16.mxu0 0
  %631 = vmatpush2.bf16.msra.mxu0 0
  %632 = vmatprep.subr.bf16.mxu0 0
  %633 = vmatpush2.bf16.msra.mxu0 0
  %634 = vmatprep.subr.bf16.mxu0 0
  %635 = vmatpush2.bf16.msra.mxu0 0
  %636 = vmatprep.subr.bf16.mxu0 0
  %637 = vmatpush2.bf16.msra.mxu0 0
  %638 = vmatprep.mubr.bf16.mxu0 0
  %639 = vmatmul.mubr.bf16.gmra.mxu0 %v534
  %v640 = vpop.f32.mrf.mxu0
  %v641 = vadd.f32 %v556, %v640
  %v642 = vpop.f32.mrf.mxu0
  %v643 = vpop.f32.mrf.mxu0
  %v644 = vpop.f32.mrf.mxu0
  %645 = vdwg.mxu0
  %v646 = vsel %vm337, %v641, -inf
  %647 = vmax.xlane.f32.xlu0 %v646
  %v648 = vpop.xlane.xlu0 %647
  %v649 = vsub.f32 %v641, %v648
  %v650 = vmul.f32 %v649, 1.442695
  %v651 = vpow.pop %v650
  %v652 = vsel %vm337, %v651, 0.0
  %653 = vadd.xlane.f32.xlu0 %v652
  %v654 = vpop.xlane.xlu0 %653
  %v655 = vlog2.pop %v654
  %v656 = vmul.f32 %v655, 0.6931472
  %v657 = vsub.f32 %v649, %v656
  %v658 = vmul.f32 %v349, 1.442695
  %v659 = vpow.pop %v658
  %v660 = vmul.f32 %v657, 1.442695
  %v661 = vpow.pop %v660
  %v662 = vadd.f32 %v659, %v661
  %v663 = vmul.f32 %v662, 0.5
  %664 = vst.msk [vmem:[%s11] sm:$0xff] %vm337, %v663
  %v665 = vld [vmem:[%s2] sm:$0xff]
  %v666 = vadd.f32 %v349, %v657
  %v667 = vmul.f32 %v665, %v666
  %v668 = vsel %vm337, %v667, 0.0
  %669 = vadd.xlane.f32.xlu0 %v668
  %v670 = vpop.xlane.xlu0 %669
  %v671 = vmul.f32 %v670, -0.5
  %vm672 = vcmask 7168
  %673 = vst.msk [vmem:[%s12] sm:$0xff] %vm672, %v671
  // Predicated region
  $region46: #{model_forward.1} parent=0 // pred_check
    _
  $region47: #{model_forward.1} parent=0 // pred_check_branch
    %675 = sbr.rel (0) target = $region49
  $region48: #{model_forward.1} parent=0 // pred_region
    _
  $region49: #{model_forward.1} parent=0 // pred_fallthru
    _
  // Predicated region
  $region50: #{model_forward.1} parent=0 // pred_check
    _
  $region51: #{model_forward.1} parent=0 // pred_check_branch
    %677 = sbr.rel (0) target = $region53
  $region52: #{model_forward.1} parent=0 // pred_region
    _
  $region53: #{model_forward.1} parent=0 // pred_fallthru
    _
  // Predicated region
  $region54: #{model_forward.1} parent=0 // pred_check
    _
  $region55: #{model_forward.1} parent=0 // pred_check_branch
    %679 = sbr.rel (0) target = $region57
  $region56: #{model_forward.1} parent=0 // pred_region
    _
  $region57: #{model_forward.1} parent=0 // pred_fallthru
    _
  // Predicated region
  $region58: #{model_forward.1} parent=0 // pred_check
    _
  $region59: #{model_forward.1} parent=0 // pred_check_branch
    %681 = sbr.rel (0) target = $region61
  $region60: #{model_forward.1} parent=0 // pred_region
    _
  $region61: #{model_forward.1} parent=0 // pred_fallthru
    _

</llo_original>
